<compile_context>
chip_gen: v5e
topology: v5e:2x2
jax: 0.10.0
libtpu: 0.0.40
codegen_flags: <defaults>
</compile_context>

<pallas_src>
import functools

import jax
import jax.numpy as jnp
from jax import lax
from jax.experimental import pallas as pl
from jax.experimental.pallas import tpu as pltpu


def _denoise_chain_kernel(x_ref, wd_ref, bd_ref, wp_ref, bp_ref, out_ref, *,
                          dilations):
    """One batch tile per grid step; the whole block chain runs in VMEM.

    x_ref:   (B_TILE, L, C)      input tile (also the first residual)
    wd_ref:  (NB, 3, C, C) bf16  dilated-conv taps, layout [blk, k, c_in, c_out]
    bd_ref:  (NB, 1, C)    f32   dilated-conv biases
    wp_ref:  (NB, C, C)    bf16  1x1-conv weights, layout [blk, c_in, c_out]
    bp_ref:  (NB, 1, C)    f32   1x1-conv biases
    out_ref: (B_TILE, L, C)
    """
    bt, l, c = x_ref.shape
    m = bt * l

    # Single HBM->VMEM load for the whole chain; fold batch into matmul M.
    x32 = x_ref[...].astype(jnp.float32).reshape(m, c)
    xb = x32.astype(jnp.bfloat16)

    # Position-within-sample for every row of the folded activation (hoisted).
    rows = lax.broadcasted_iota(jnp.int32, (m, 1), 0)
    t_idx = lax.rem(rows, jnp.int32(l))

    for blk, d in enumerate(dilations):          # static unroll over the chain
        # Shifted conv taps (zero boundaries == Conv1d padding=dilation) via
        # XLU rotates + VPU boundary masks; bf16 for the MXU.  The mask also
        # zeroes exactly the rows that the fold-level roll would leak across
        # batch boundaries, so rolling the folded array is correct.
        tap_prev = jnp.where(t_idx >= d,
                             pltpu.roll(x32, d, axis=0),
                             0.0).astype(jnp.bfloat16)            # x[t - d]
        tap_next = jnp.where(t_idx < l - d,
                             pltpu.roll(x32, (m - d) % m, axis=0),
                             0.0).astype(jnp.bfloat16)            # x[t + d]

        # Dilated conv (kernel size 3) as 3 bf16 matmuls, f32 accumulation.
        acc = jnp.dot(xb, wd_ref[blk, 1, :, :],
                      preferred_element_type=jnp.float32)
        acc = acc + jnp.dot(tap_prev, wd_ref[blk, 0, :, :],
                            preferred_element_type=jnp.float32)
        acc = acc + jnp.dot(tap_next, wd_ref[blk, 2, :, :],
                            preferred_element_type=jnp.float32)
        acc = acc + bd_ref[blk, :, :]

        # 1x1 conv + bias, residual, leaky_relu(0.2), all elementwise in f32.
        z = jnp.dot(acc.astype(jnp.bfloat16), wp_ref[blk, :, :],
                    preferred_element_type=jnp.float32)
        z = z + bp_ref[blk, :, :]
        r = z + x32
        x32 = jnp.maximum(r, 0.2 * r)
        xb = x32.astype(jnp.bfloat16)

    out_ref[...] = x32.reshape(bt, l, c).astype(out_ref.dtype)


def _pick_b_tile(n, target_steps=8):
    """Largest batch tile that still yields ~target_steps grid steps."""
    cap = max(1, n // target_steps)
    for bt in range(cap, 0, -1):
        if n % bt == 0:
            return bt
    return 1


def denoising_chain_nlc(x_nlc, params, dilations, b_tile=None):
    """Fused DilatedBlock chain on a channels-last (N, L, C) tensor."""
    n, l, c = x_nlc.shape
    nb = len(dilations)
    assert nb == len(params) and nb >= 1
    assert l % 8 == 0, "L must be a multiple of 8 (sublane-aligned fold)"
    for d in dilations:
        assert 0 < d < l, "dilation must be smaller than the sequence length"
    # For production shapes keep C a multiple of 128 (lane-dense output stores).

    if b_tile is None:
        b_tile = _pick_b_tile(n)
    assert n % b_tile == 0
    grid_steps = n // b_tile

    # Stack weights across the chain; pre-cast matmul operands to bf16 once.
    wd = jnp.stack([p[0] for p in params]).astype(jnp.bfloat16)   # (nb, 3, C, C)
    bd = jnp.stack([p[1] for p in params]).astype(jnp.float32)    # (nb, 1, C)
    wp = jnp.stack([p[2] for p in params]).astype(jnp.bfloat16)   # (nb, C, C)
    bp = jnp.stack([p[3] for p in params]).astype(jnp.float32)    # (nb, 1, C)

    kernel = functools.partial(_denoise_chain_kernel,
                               dilations=tuple(int(d) for d in dilations))

    itemsize = jnp.dtype(x_nlc.dtype).itemsize
    tile_bytes = b_tile * l * c * 4
    weight_bytes = wd.size * 2 + wp.size * 2 + (bd.size + bp.size) * 4
    flops = 2 * n * l * c * c * 4 * nb
    bytes_accessed = 2 * n * l * c * itemsize + weight_bytes

    # VMEM budget: double-buffered in/out tiles + resident weights + a handful
    # of full-tile intermediates (taps / acc / z), capped at 3/4 of physical
    # VMEM so it stays safe on v7x (64 MiB) while allowing bigger tiles on
    # v5e/v6e (128 MiB).
    try:
        phys_vmem = int(pltpu.get_tpu_info().vmem_capacity_bytes)
    except Exception:
        phys_vmem = 64 * 1024 * 1024
    need = 12 * tile_bytes + 2 * weight_bytes
    vmem_limit = int(min(3 * phys_vmem // 4,
                         max(32 * 1024 * 1024, 2 * need)))

    return pl.pallas_call(
        kernel,
        out_shape=jax.ShapeDtypeStruct((n, l, c), x_nlc.dtype),
        grid_spec=pltpu.PrefetchScalarGridSpec(
            num_scalar_prefetch=0,
            grid=(grid_steps,),
            in_specs=[
                pl.BlockSpec((b_tile, l, c), lambda i: (i, 0, 0)),     # x (+residual)
                pl.BlockSpec((nb, 3, c, c),  lambda i: (0, 0, 0, 0)),  # dilated weights
                pl.BlockSpec((nb, 1, c),     lambda i: (0, 0, 0)),     # dilated biases
                pl.BlockSpec((nb, c, c),     lambda i: (0, 0, 0)),     # 1x1 weights
                pl.BlockSpec((nb, 1, c),     lambda i: (0, 0, 0)),     # 1x1 biases
            ],
            out_specs=pl.BlockSpec((b_tile, l, c), lambda i: (i, 0, 0)),
        ),
        compiler_params=pltpu.CompilerParams(
            dimension_semantics=("parallel",),
            vmem_limit_bytes=vmem_limit),
        cost_estimate=pl.CostEstimate(flops=flops, transcendentals=0,
                                      bytes_accessed=bytes_accessed),
    )(x_nlc, wd, bd, wp, bp)


def denoising_layer(x_ncl, params, dilations):
    """DenoisingLayer.forward for to_audio=False, is_disc=False (DilatedBlock chain).

    x_ncl:  (N, C, L) in the PyTorch NCL convention.
    params: list of (wd, bd, wp, bp) per block.  wd is (3, C, C) — the torch
            Conv1d weight (out, in, k) transposed to [k, in, out]; wp is (C, C)
            stored as [in, out]; biases are (1, C).
    """
    # TODO(synk): the to_audio branch (OscillatorBank / NoiseModel) and the
    # is_disc pred_feat head are not defined in the provided spec; only the
    # default forward path (the DilatedBlock chain) is implemented.
    x = jnp.transpose(x_ncl, (0, 2, 1))          # NCL -> NLC, once
    x = denoising_chain_nlc(x, params, dilations)
    return jnp.transpose(x, (0, 2, 1))           # NLC -> NCL, once


def _reference(x_ncl, params, dilations, quantize):
    """Pure-jnp reference (pad + shifted slices — a different code path).

    quantize=True rounds the matmul operands to bf16 exactly as the kernel's
    MXU path does, so that comparison can stay tight.
    """
    def q(v):
        v = v.astype(jnp.float32)
        return v.astype(jnp.bfloat16).astype(jnp.float32) if quantize else v

    x = jnp.transpose(x_ncl, (0, 2, 1)).astype(jnp.float32)
    for (wd, bd, wp, bp), d in zip(params, dilations):
        n, l, c = x.shape
        xp = jnp.pad(x, ((0, 0), (d, d), (0, 0)))
        y = jnp.zeros((n, l, c), jnp.float32)
        for k in range(3):
            tap = xp[:, k * d: k * d + l, :]
            y = y + jnp.einsum('nlc,cd->nld', q(tap), q(wd[k]))
        y = y + bd.astype(jnp.float32)
        z = jnp.einsum('nlc,cd->nld', q(y), q(wp)) + bp.astype(jnp.float32)
        r = z + x
        x = jnp.where(r >= 0, r, 0.2 * r)
    return jnp.transpose(x, (0, 2, 1))


if __name__ == "__main__":
    # Small shapes consistent with the module (Conv1d input is (N, C, L)).
    N, C, L = 2, 4, 16
    DILATIONS = (1, 2, 4)

    key = jax.random.PRNGKey(0)
    kx, key = jax.random.split(key)
    x = jax.random.normal(kx, (N, C, L), jnp.float32)

    params = []
    for _ in DILATIONS:
        kwd, kbd, kwp, kbp, key = jax.random.split(key, 5)
        params.append((
            0.1 * jax.random.normal(kwd, (3, C, C), jnp.float32),   # [k, in, out]
            0.1 * jax.random.normal(kbd, (1, C), jnp.float32),
            0.1 * jax.random.normal(kwp, (C, C), jnp.float32),      # [in, out]
            0.1 * jax.random.normal(kbp, (1, C), jnp.float32),
        ))

    out = denoising_layer(x, params, DILATIONS)
    out = jax.block_until_ready(out)
    assert out.shape == (N, C, L)

    # Tight check against a reference that applies the same bf16 operand
    # rounding the MXU path sees.
    ref_q = _reference(x, params, DILATIONS, quantize=True)
    assert jnp.allclose(out, ref_q, atol=1e-3, rtol=1e-3), \
        "mismatch vs bf16-emulating reference"

    # Loose sanity check against the pure-f32 (PyTorch-semantics) reference.
    ref_f = _reference(x, params, DILATIONS, quantize=False)
    assert jnp.allclose(out, ref_f, atol=5e-2, rtol=5e-2), \
        "mismatch vs f32 reference"

    print("KERNEL_OK")
</pallas_src>

<mosaic_0001>
module attributes {stable_mosaic.version = 11 : i64} {
  func.func @_denoise_chain_kernel(%arg0: i32, %arg1: memref<1x16x4xf32, #tpu.memory_space<vmem>>, %arg2: memref<3x3x4x4xbf16, #tpu.memory_space<vmem>>, %arg3: memref<3x1x4xf32, #tpu.memory_space<vmem>>, %arg4: memref<3x4x4xbf16, #tpu.memory_space<vmem>>, %arg5: memref<3x1x4xf32, #tpu.memory_space<vmem>>, %arg6: memref<1x16x4xf32, #tpu.memory_space<vmem>>) attributes {dimension_semantics = [#tpu.dimension_semantics<parallel>], iteration_bounds = array<i64: 2>, scalar_prefetch = 0 : i64, scratch_operands = 0 : i64, tpu.core_type = #tpu.core_type<tc>, window_params = [{transform_indices = @transform_0, window_bounds = array<i64: 1, 16, 4>}, {pipeline_mode = #tpu.pipeline_mode<synchronous>, transform_indices = @transform_1, window_bounds = array<i64: 3, 3, 4, 4>}, {pipeline_mode = #tpu.pipeline_mode<synchronous>, transform_indices = @transform_2, window_bounds = array<i64: 3, 1, 4>}, {pipeline_mode = #tpu.pipeline_mode<synchronous>, transform_indices = @transform_3, window_bounds = array<i64: 3, 4, 4>}, {pipeline_mode = #tpu.pipeline_mode<synchronous>, transform_indices = @transform_4, window_bounds = array<i64: 3, 1, 4>}, {transform_indices = @transform_5, window_bounds = array<i64: 1, 16, 4>}]} {
    %c0 = arith.constant 0 : index
    %c0_0 = arith.constant 0 : index
    %c0_1 = arith.constant 0 : index
    %0 = vector.load %arg1[%c0, %c0_0, %c0_1] : memref<1x16x4xf32, #tpu.memory_space<vmem>>, vector<1x16x4xf32>
    %1 = vector.shape_cast %0 : vector<1x16x4xf32> to vector<16x4xf32>
    %2 = arith.truncf %1 : vector<16x4xf32> to vector<16x4xbf16>
    %3 = tpu.iota {dimensions = array<i32: 0>} : vector<16x1xi32>
    %c16_i32 = arith.constant 16 : i32
    %4 = vector.broadcast %c16_i32 : i32 to vector<16x1xi32>
    %5 = arith.remsi %3, %4 : vector<16x1xi32>
    %c1_i32 = arith.constant 1 : i32
    %6 = vector.broadcast %c1_i32 : i32 to vector<16x1xi32>
    %7 = arith.cmpi sge, %5, %6 : vector<16x1xi32>
    %c1_i32_2 = arith.constant 1 : i32
    %8 = tpu.dynamic_rotate %1 by %c1_i32_2 dim 0 : vector<16x4xf32>, i32 -> vector<16x4xf32>
    %cst = arith.constant 0.000000e+00 : f32
    %9 = vector.shape_cast %7 : vector<16x1xi1> to vector<16x1xi1>
    %10 = vector.broadcast %9 : vector<16x1xi1> to vector<16x4xi1>
    %11 = vector.broadcast %cst : f32 to vector<16x4xf32>
    %12 = arith.select %10, %8, %11 : vector<16x4xi1>, vector<16x4xf32>
    %13 = arith.truncf %12 : vector<16x4xf32> to vector<16x4xbf16>
    %c15_i32 = arith.constant 15 : i32
    %14 = vector.broadcast %c15_i32 : i32 to vector<16x1xi32>
    %15 = arith.cmpi slt, %5, %14 : vector<16x1xi32>
    %c15_i32_3 = arith.constant 15 : i32
    %16 = tpu.dynamic_rotate %1 by %c15_i32_3 dim 0 : vector<16x4xf32>, i32 -> vector<16x4xf32>
    %cst_4 = arith.constant 0.000000e+00 : f32
    %17 = vector.shape_cast %15 : vector<16x1xi1> to vector<16x1xi1>
    %18 = vector.broadcast %17 : vector<16x1xi1> to vector<16x4xi1>
    %19 = vector.broadcast %cst_4 : f32 to vector<16x4xf32>
    %20 = arith.select %18, %16, %19 : vector<16x4xi1>, vector<16x4xf32>
    %21 = arith.truncf %20 : vector<16x4xf32> to vector<16x4xbf16>
    %c0_5 = arith.constant 0 : index
    %c1 = arith.constant 1 : index
    %c0_6 = arith.constant 0 : index
    %c0_7 = arith.constant 0 : index
    %22 = vector.load %arg2[%c0_5, %c1, %c0_6, %c0_7] : memref<3x3x4x4xbf16, #tpu.memory_space<vmem>>, vector<1x1x4x4xbf16>
    %23 = vector.shape_cast %22 : vector<1x1x4x4xbf16> to vector<4x4xbf16>
    %cst_8 = arith.constant dense<0.000000e+00> : vector<16x4xf32>
    %24 = tpu.matmul %2, %23, %cst_8 {dimension_numbers = #tpu.dot_dimension_numbers<[1], [0], [0], [1], [0, 0, 1, 1], [], []>} : vector<16x4xbf16>, vector<4x4xbf16>, vector<16x4xf32> -> vector<16x4xf32>
    %c0_9 = arith.constant 0 : index
    %c0_10 = arith.constant 0 : index
    %c0_11 = arith.constant 0 : index
    %c0_12 = arith.constant 0 : index
    %25 = vector.load %arg2[%c0_9, %c0_10, %c0_11, %c0_12] : memref<3x3x4x4xbf16, #tpu.memory_space<vmem>>, vector<1x1x4x4xbf16>
    %26 = vector.shape_cast %25 : vector<1x1x4x4xbf16> to vector<4x4xbf16>
    %cst_13 = arith.constant dense<0.000000e+00> : vector<16x4xf32>
    %27 = tpu.matmul %13, %26, %cst_13 {dimension_numbers = #tpu.dot_dimension_numbers<[1], [0], [0], [1], [0, 0, 1, 1], [], []>} : vector<16x4xbf16>, vector<4x4xbf16>, vector<16x4xf32> -> vector<16x4xf32>
    %28 = arith.addf %24, %27 : vector<16x4xf32>
    %c0_14 = arith.constant 0 : index
    %c2 = arith.constant 2 : index
    %c0_15 = arith.constant 0 : index
    %c0_16 = arith.constant 0 : index
    %29 = vector.load %arg2[%c0_14, %c2, %c0_15, %c0_16] : memref<3x3x4x4xbf16, #tpu.memory_space<vmem>>, vector<1x1x4x4xbf16>
    %30 = vector.shape_cast %29 : vector<1x1x4x4xbf16> to vector<4x4xbf16>
    %cst_17 = arith.constant dense<0.000000e+00> : vector<16x4xf32>
    %31 = tpu.matmul %21, %30, %cst_17 {dimension_numbers = #tpu.dot_dimension_numbers<[1], [0], [0], [1], [0, 0, 1, 1], [], []>} : vector<16x4xbf16>, vector<4x4xbf16>, vector<16x4xf32> -> vector<16x4xf32>
    %32 = arith.addf %28, %31 : vector<16x4xf32>
    %c0_18 = arith.constant 0 : index
    %c0_19 = arith.constant 0 : index
    %c0_20 = arith.constant 0 : index
    %33 = vector.load %arg3[%c0_18, %c0_19, %c0_20] : memref<3x1x4xf32, #tpu.memory_space<vmem>>, vector<1x1x4xf32>
    %34 = vector.shape_cast %33 : vector<1x1x4xf32> to vector<1x4xf32>
    %35 = vector.broadcast %34 : vector<1x4xf32> to vector<16x4xf32>
    %36 = arith.addf %32, %35 : vector<16x4xf32>
    %37 = arith.truncf %36 : vector<16x4xf32> to vector<16x4xbf16>
    %c0_21 = arith.constant 0 : index
    %c0_22 = arith.constant 0 : index
    %c0_23 = arith.constant 0 : index
    %38 = vector.load %arg4[%c0_21, %c0_22, %c0_23] : memref<3x4x4xbf16, #tpu.memory_space<vmem>>, vector<1x4x4xbf16>
    %39 = vector.shape_cast %38 : vector<1x4x4xbf16> to vector<4x4xbf16>
    %cst_24 = arith.constant dense<0.000000e+00> : vector<16x4xf32>
    %40 = tpu.matmul %37, %39, %cst_24 {dimension_numbers = #tpu.dot_dimension_numbers<[1], [0], [0], [1], [0, 0, 1, 1], [], []>} : vector<16x4xbf16>, vector<4x4xbf16>, vector<16x4xf32> -> vector<16x4xf32>
    %c0_25 = arith.constant 0 : index
    %c0_26 = arith.constant 0 : index
    %c0_27 = arith.constant 0 : index
    %41 = vector.load %arg5[%c0_25, %c0_26, %c0_27] : memref<3x1x4xf32, #tpu.memory_space<vmem>>, vector<1x1x4xf32>
    %42 = vector.shape_cast %41 : vector<1x1x4xf32> to vector<1x4xf32>
    %43 = vector.broadcast %42 : vector<1x4xf32> to vector<16x4xf32>
    %44 = arith.addf %40, %43 : vector<16x4xf32>
    %45 = arith.addf %44, %1 : vector<16x4xf32>
    %cst_28 = arith.constant 2.000000e-01 : f32
    %46 = vector.broadcast %cst_28 : f32 to vector<16x4xf32>
    %47 = arith.mulf %46, %45 : vector<16x4xf32>
    %48 = arith.maximumf %45, %47 : vector<16x4xf32>
    %49 = arith.truncf %48 : vector<16x4xf32> to vector<16x4xbf16>
    %c2_i32 = arith.constant 2 : i32
    %50 = vector.broadcast %c2_i32 : i32 to vector<16x1xi32>
    %51 = arith.cmpi sge, %5, %50 : vector<16x1xi32>
    %c2_i32_29 = arith.constant 2 : i32
    %52 = tpu.dynamic_rotate %48 by %c2_i32_29 dim 0 : vector<16x4xf32>, i32 -> vector<16x4xf32>
    %cst_30 = arith.constant 0.000000e+00 : f32
    %53 = vector.shape_cast %51 : vector<16x1xi1> to vector<16x1xi1>
    %54 = vector.broadcast %53 : vector<16x1xi1> to vector<16x4xi1>
    %55 = vector.broadcast %cst_30 : f32 to vector<16x4xf32>
    %56 = arith.select %54, %52, %55 : vector<16x4xi1>, vector<16x4xf32>
    %57 = arith.truncf %56 : vector<16x4xf32> to vector<16x4xbf16>
    %c14_i32 = arith.constant 14 : i32
    %58 = vector.broadcast %c14_i32 : i32 to vector<16x1xi32>
    %59 = arith.cmpi slt, %5, %58 : vector<16x1xi32>
    %c14_i32_31 = arith.constant 14 : i32
    %60 = tpu.dynamic_rotate %48 by %c14_i32_31 dim 0 : vector<16x4xf32>, i32 -> vector<16x4xf32>
    %cst_32 = arith.constant 0.000000e+00 : f32
    %61 = vector.shape_cast %59 : vector<16x1xi1> to vector<16x1xi1>
    %62 = vector.broadcast %61 : vector<16x1xi1> to vector<16x4xi1>
    %63 = vector.broadcast %cst_32 : f32 to vector<16x4xf32>
    %64 = arith.select %62, %60, %63 : vector<16x4xi1>, vector<16x4xf32>
    %65 = arith.truncf %64 : vector<16x4xf32> to vector<16x4xbf16>
    %c1_33 = arith.constant 1 : index
    %c1_34 = arith.constant 1 : index
    %c0_35 = arith.constant 0 : index
    %c0_36 = arith.constant 0 : index
    %66 = vector.load %arg2[%c1_33, %c1_34, %c0_35, %c0_36] : memref<3x3x4x4xbf16, #tpu.memory_space<vmem>>, vector<1x1x4x4xbf16>
    %67 = vector.shape_cast %66 : vector<1x1x4x4xbf16> to vector<4x4xbf16>
    %cst_37 = arith.constant dense<0.000000e+00> : vector<16x4xf32>
    %68 = tpu.matmul %49, %67, %cst_37 {dimension_numbers = #tpu.dot_dimension_numbers<[1], [0], [0], [1], [0, 0, 1, 1], [], []>} : vector<16x4xbf16>, vector<4x4xbf16>, vector<16x4xf32> -> vector<16x4xf32>
    %c1_38 = arith.constant 1 : index
    %c0_39 = arith.constant 0 : index
    %c0_40 = arith.constant 0 : index
    %c0_41 = arith.constant 0 : index
    %69 = vector.load %arg2[%c1_38, %c0_39, %c0_40, %c0_41] : memref<3x3x4x4xbf16, #tpu.memory_space<vmem>>, vector<1x1x4x4xbf16>
    %70 = vector.shape_cast %69 : vector<1x1x4x4xbf16> to vector<4x4xbf16>
    %cst_42 = arith.constant dense<0.000000e+00> : vector<16x4xf32>
    %71 = tpu.matmul %57, %70, %cst_42 {dimension_numbers = #tpu.dot_dimension_numbers<[1], [0], [0], [1], [0, 0, 1, 1], [], []>} : vector<16x4xbf16>, vector<4x4xbf16>, vector<16x4xf32> -> vector<16x4xf32>
    %72 = arith.addf %68, %71 : vector<16x4xf32>
    %c1_43 = arith.constant 1 : index
    %c2_44 = arith.constant 2 : index
    %c0_45 = arith.constant 0 : index
    %c0_46 = arith.constant 0 : index
    %73 = vector.load %arg2[%c1_43, %c2_44, %c0_45, %c0_46] : memref<3x3x4x4xbf16, #tpu.memory_space<vmem>>, vector<1x1x4x4xbf16>
    %74 = vector.shape_cast %73 : vector<1x1x4x4xbf16> to vector<4x4xbf16>
    %cst_47 = arith.constant dense<0.000000e+00> : vector<16x4xf32>
    %75 = tpu.matmul %65, %74, %cst_47 {dimension_numbers = #tpu.dot_dimension_numbers<[1], [0], [0], [1], [0, 0, 1, 1], [], []>} : vector<16x4xbf16>, vector<4x4xbf16>, vector<16x4xf32> -> vector<16x4xf32>
    %76 = arith.addf %72, %75 : vector<16x4xf32>
    %c1_48 = arith.constant 1 : index
    %c0_49 = arith.constant 0 : index
    %c0_50 = arith.constant 0 : index
    %77 = vector.load %arg3[%c1_48, %c0_49, %c0_50] : memref<3x1x4xf32, #tpu.memory_space<vmem>>, vector<1x1x4xf32>
    %78 = vector.shape_cast %77 : vector<1x1x4xf32> to vector<1x4xf32>
    %79 = vector.broadcast %78 : vector<1x4xf32> to vector<16x4xf32>
    %80 = arith.addf %76, %79 : vector<16x4xf32>
    %81 = arith.truncf %80 : vector<16x4xf32> to vector<16x4xbf16>
    %c1_51 = arith.constant 1 : index
    %c0_52 = arith.constant 0 : index
    %c0_53 = arith.constant 0 : index
    %82 = vector.load %arg4[%c1_51, %c0_52, %c0_53] : memref<3x4x4xbf16, #tpu.memory_space<vmem>>, vector<1x4x4xbf16>
    %83 = vector.shape_cast %82 : vector<1x4x4xbf16> to vector<4x4xbf16>
    %cst_54 = arith.constant dense<0.000000e+00> : vector<16x4xf32>
    %84 = tpu.matmul %81, %83, %cst_54 {dimension_numbers = #tpu.dot_dimension_numbers<[1], [0], [0], [1], [0, 0, 1, 1], [], []>} : vector<16x4xbf16>, vector<4x4xbf16>, vector<16x4xf32> -> vector<16x4xf32>
    %c1_55 = arith.constant 1 : index
    %c0_56 = arith.constant 0 : index
    %c0_57 = arith.constant 0 : index
    %85 = vector.load %arg5[%c1_55, %c0_56, %c0_57] : memref<3x1x4xf32, #tpu.memory_space<vmem>>, vector<1x1x4xf32>
    %86 = vector.shape_cast %85 : vector<1x1x4xf32> to vector<1x4xf32>
    %87 = vector.broadcast %86 : vector<1x4xf32> to vector<16x4xf32>
    %88 = arith.addf %84, %87 : vector<16x4xf32>
    %89 = arith.addf %88, %48 : vector<16x4xf32>
    %cst_58 = arith.constant 2.000000e-01 : f32
    %90 = vector.broadcast %cst_58 : f32 to vector<16x4xf32>
    %91 = arith.mulf %90, %89 : vector<16x4xf32>
    %92 = arith.maximumf %89, %91 : vector<16x4xf32>
    %93 = arith.truncf %92 : vector<16x4xf32> to vector<16x4xbf16>
    %c4_i32 = arith.constant 4 : i32
    %94 = vector.broadcast %c4_i32 : i32 to vector<16x1xi32>
    %95 = arith.cmpi sge, %5, %94 : vector<16x1xi32>
    %c4_i32_59 = arith.constant 4 : i32
    %96 = tpu.dynamic_rotate %92 by %c4_i32_59 dim 0 : vector<16x4xf32>, i32 -> vector<16x4xf32>
    %cst_60 = arith.constant 0.000000e+00 : f32
    %97 = vector.shape_cast %95 : vector<16x1xi1> to vector<16x1xi1>
    %98 = vector.broadcast %97 : vector<16x1xi1> to vector<16x4xi1>
    %99 = vector.broadcast %cst_60 : f32 to vector<16x4xf32>
    %100 = arith.select %98, %96, %99 : vector<16x4xi1>, vector<16x4xf32>
    %101 = arith.truncf %100 : vector<16x4xf32> to vector<16x4xbf16>
    %c12_i32 = arith.constant 12 : i32
    %102 = vector.broadcast %c12_i32 : i32 to vector<16x1xi32>
    %103 = arith.cmpi slt, %5, %102 : vector<16x1xi32>
    %c12_i32_61 = arith.constant 12 : i32
    %104 = tpu.dynamic_rotate %92 by %c12_i32_61 dim 0 : vector<16x4xf32>, i32 -> vector<16x4xf32>
    %cst_62 = arith.constant 0.000000e+00 : f32
    %105 = vector.shape_cast %103 : vector<16x1xi1> to vector<16x1xi1>
    %106 = vector.broadcast %105 : vector<16x1xi1> to vector<16x4xi1>
    %107 = vector.broadcast %cst_62 : f32 to vector<16x4xf32>
    %108 = arith.select %106, %104, %107 : vector<16x4xi1>, vector<16x4xf32>
    %109 = arith.truncf %108 : vector<16x4xf32> to vector<16x4xbf16>
    %c2_63 = arith.constant 2 : index
    %c1_64 = arith.constant 1 : index
    %c0_65 = arith.constant 0 : index
    %c0_66 = arith.constant 0 : index
    %110 = vector.load %arg2[%c2_63, %c1_64, %c0_65, %c0_66] : memref<3x3x4x4xbf16, #tpu.memory_space<vmem>>, vector<1x1x4x4xbf16>
    %111 = vector.shape_cast %110 : vector<1x1x4x4xbf16> to vector<4x4xbf16>
    %cst_67 = arith.constant dense<0.000000e+00> : vector<16x4xf32>
    %112 = tpu.matmul %93, %111, %cst_67 {dimension_numbers = #tpu.dot_dimension_numbers<[1], [0], [0], [1], [0, 0, 1, 1], [], []>} : vector<16x4xbf16>, vector<4x4xbf16>, vector<16x4xf32> -> vector<16x4xf32>
    %c2_68 = arith.constant 2 : index
    %c0_69 = arith.constant 0 : index
    %c0_70 = arith.constant 0 : index
    %c0_71 = arith.constant 0 : index
    %113 = vector.load %arg2[%c2_68, %c0_69, %c0_70, %c0_71] : memref<3x3x4x4xbf16, #tpu.memory_space<vmem>>, vector<1x1x4x4xbf16>
    %114 = vector.shape_cast %113 : vector<1x1x4x4xbf16> to vector<4x4xbf16>
    %cst_72 = arith.constant dense<0.000000e+00> : vector<16x4xf32>
    %115 = tpu.matmul %101, %114, %cst_72 {dimension_numbers = #tpu.dot_dimension_numbers<[1], [0], [0], [1], [0, 0, 1, 1], [], []>} : vector<16x4xbf16>, vector<4x4xbf16>, vector<16x4xf32> -> vector<16x4xf32>
    %116 = arith.addf %112, %115 : vector<16x4xf32>
    %c2_73 = arith.constant 2 : index
    %c2_74 = arith.constant 2 : index
    %c0_75 = arith.constant 0 : index
    %c0_76 = arith.constant 0 : index
    %117 = vector.load %arg2[%c2_73, %c2_74, %c0_75, %c0_76] : memref<3x3x4x4xbf16, #tpu.memory_space<vmem>>, vector<1x1x4x4xbf16>
    %118 = vector.shape_cast %117 : vector<1x1x4x4xbf16> to vector<4x4xbf16>
    %cst_77 = arith.constant dense<0.000000e+00> : vector<16x4xf32>
    %119 = tpu.matmul %109, %118, %cst_77 {dimension_numbers = #tpu.dot_dimension_numbers<[1], [0], [0], [1], [0, 0, 1, 1], [], []>} : vector<16x4xbf16>, vector<4x4xbf16>, vector<16x4xf32> -> vector<16x4xf32>
    %120 = arith.addf %116, %119 : vector<16x4xf32>
    %c2_78 = arith.constant 2 : index
    %c0_79 = arith.constant 0 : index
    %c0_80 = arith.constant 0 : index
    %121 = vector.load %arg3[%c2_78, %c0_79, %c0_80] : memref<3x1x4xf32, #tpu.memory_space<vmem>>, vector<1x1x4xf32>
    %122 = vector.shape_cast %121 : vector<1x1x4xf32> to vector<1x4xf32>
    %123 = vector.broadcast %122 : vector<1x4xf32> to vector<16x4xf32>
    %124 = arith.addf %120, %123 : vector<16x4xf32>
    %125 = arith.truncf %124 : vector<16x4xf32> to vector<16x4xbf16>
    %c2_81 = arith.constant 2 : index
    %c0_82 = arith.constant 0 : index
    %c0_83 = arith.constant 0 : index
    %126 = vector.load %arg4[%c2_81, %c0_82, %c0_83] : memref<3x4x4xbf16, #tpu.memory_space<vmem>>, vector<1x4x4xbf16>
    %127 = vector.shape_cast %126 : vector<1x4x4xbf16> to vector<4x4xbf16>
    %cst_84 = arith.constant dense<0.000000e+00> : vector<16x4xf32>
    %128 = tpu.matmul %125, %127, %cst_84 {dimension_numbers = #tpu.dot_dimension_numbers<[1], [0], [0], [1], [0, 0, 1, 1], [], []>} : vector<16x4xbf16>, vector<4x4xbf16>, vector<16x4xf32> -> vector<16x4xf32>
    %c2_85 = arith.constant 2 : index
    %c0_86 = arith.constant 0 : index
    %c0_87 = arith.constant 0 : index
    %129 = vector.load %arg5[%c2_85, %c0_86, %c0_87] : memref<3x1x4xf32, #tpu.memory_space<vmem>>, vector<1x1x4xf32>
    %130 = vector.shape_cast %129 : vector<1x1x4xf32> to vector<1x4xf32>
    %131 = vector.broadcast %130 : vector<1x4xf32> to vector<16x4xf32>
    %132 = arith.addf %128, %131 : vector<16x4xf32>
    %133 = arith.addf %132, %92 : vector<16x4xf32>
    %cst_88 = arith.constant 2.000000e-01 : f32
    %134 = vector.broadcast %cst_88 : f32 to vector<16x4xf32>
    %135 = arith.mulf %134, %133 : vector<16x4xf32>
    %136 = arith.maximumf %133, %135 : vector<16x4xf32>
    %137 = vector.shape_cast %136 : vector<16x4xf32> to vector<1x16x4xf32>
    %c0_89 = arith.constant 0 : index
    %c0_90 = arith.constant 0 : index
    %c0_91 = arith.constant 0 : index
    %138 = vector.load %arg6[%c0_89, %c0_90, %c0_91] : memref<1x16x4xf32, #tpu.memory_space<vmem>>, vector<1x16x4xf32>
    tpu.vector_store %arg6[%c0_89, %c0_90, %c0_91], %137 {strides = array<i32>} : memref<1x16x4xf32, #tpu.memory_space<vmem>>, vector<1x16x4xf32>,
    return
  }
  func.func @transform_0(%arg0: i32) -> (i32, i32, i32) {
    %c0_i32 = arith.constant 0 : i32
    %c0_i32_0 = arith.constant 0 : i32
    %c0_i32_1 = arith.constant 0 : i32
    return %arg0, %c0_i32, %c0_i32_0 : i32, i32, i32
  }
  func.func @transform_1(%arg0: i32) -> (i32, i32, i32, i32) {
    %c0_i32 = arith.constant 0 : i32
    %c0_i32_0 = arith.constant 0 : i32
    %c0_i32_1 = arith.constant 0 : i32
    %c0_i32_2 = arith.constant 0 : i32
    %c0_i32_3 = arith.constant 0 : i32
    return %c0_i32, %c0_i32_0, %c0_i32_1, %c0_i32_2 : i32, i32, i32, i32
  }
  func.func @transform_2(%arg0: i32) -> (i32, i32, i32) {
    %c0_i32 = arith.constant 0 : i32
    %c0_i32_0 = arith.constant 0 : i32
    %c0_i32_1 = arith.constant 0 : i32
    %c0_i32_2 = arith.constant 0 : i32
    return %c0_i32, %c0_i32_0, %c0_i32_1 : i32, i32, i32
  }
  func.func @transform_3(%arg0: i32) -> (i32, i32, i32) {
    %c0_i32 = arith.constant 0 : i32
    %c0_i32_0 = arith.constant 0 : i32
    %c0_i32_1 = arith.constant 0 : i32
    %c0_i32_2 = arith.constant 0 : i32
    return %c0_i32, %c0_i32_0, %c0_i32_1 : i32, i32, i32
  }
  func.func @transform_4(%arg0: i32) -> (i32, i32, i32) {
    %c0_i32 = arith.constant 0 : i32
    %c0_i32_0 = arith.constant 0 : i32
    %c0_i32_1 = arith.constant 0 : i32
    %c0_i32_2 = arith.constant 0 : i32
    return %c0_i32, %c0_i32_0, %c0_i32_1 : i32, i32, i32
  }
  func.func @transform_5(%arg0: i32) -> (i32, i32, i32) {
    %c0_i32 = arith.constant 0 : i32
    %c0_i32_0 = arith.constant 0 : i32
    %c0_i32_1 = arith.constant 0 : i32
    return %arg0, %c0_i32, %c0_i32_0 : i32, i32, i32
  }
}

</mosaic_0001>

<llo_original>
// kernel: tpu_custom_call.1
$region0: #{tpu_custom_call.1}
  #allocation0 [shape = 'u32[]', space=smem, size = 0x4, offset = 0x4, fixed_abs, tag = 'smem constant byte address 0x4 - core index']
  #allocation1 [shape = 'u32[72,128]{1,0:T(1,128)}', space=vmem, size = 0x9000, scoped, tag = 'internal scratch']
  %s0 = inlined_call_operand.vmem [shape: f32[2,16,4], index: 0, kind: input, shape index: {}]
  %s1 = inlined_call_operand.vmem [shape: bf16[3,3,4,4], index: 1, kind: input, shape index: {}]
  %s2 = inlined_call_operand.vmem [shape: f32[3,1,4], index: 2, kind: input, shape index: {}]
  %s3 = inlined_call_operand.vmem [shape: bf16[3,4,4], index: 3, kind: input, shape index: {}]
  %s4 = inlined_call_operand.vmem [shape: f32[3,1,4], index: 4, kind: input, shape index: {}]
  %s5 = inlined_call_operand.vmem [shape: f32[2,16,4], index: 5, kind: output, shape index: {}]
  %s6 = sld [smem:[#allocation0]]
  $region53: #{tpu_custom_call.1} parent=0
    _
  %s8 = ssub.s32 1, %s6
  %s9 = scalar_select 0, %s8, %s6
  loop: start=0, step=1, limit=4
  $region2: #{tpu_custom_call.1} parent=0 // loop_pre_header
    _
  $region3: #{tpu_custom_call.1} parent=0 // loop_header
    %s11 = sphi 0, %s15
    %p12 = scmp.ge.s32.totalorder %s11, 4
    %s21 = sphi 0, %s23
    %s24 = sphi 0, %s21
    %s25 = sphi 0, %s24
    %s41 = sphi 0, %s25
    %s45 = sphi 0, %s45
    %s47 = sphi 0, %s45
    %s48 = sphi 0, %s47
    %s62 = sphi 0, %s48
    %s66 = sphi 0, %s66
    %s68 = sphi 0, %s66
    %s69 = sphi 0, %s68
    %s83 = sphi 0, %s69
    %s87 = sphi 0, %s87
    %s89 = sphi 0, %s87
    %s90 = sphi 0, %s89
    %s104 = sphi 0, %s90
    %s108 = sphi 0, %s108
    %s110 = sphi 0, %s108
    %s111 = sphi 0, %s110
    %s125 = sphi 0, %s111
    %s131 = sphi 0, %s133
    %s134 = sphi 0, %s131
    %s135 = sphi 0, %s134
    %s151 = sphi 0, %s135
  $region4: #{tpu_custom_call.1} parent=0 // loop_header_branch
    %14 = sbr.rel (%p12) target = $region8
  $region5: #{tpu_custom_call.1} parent=0 // loop_body
    %s16 = ssub.s32 %s11, 1
    %s17 = ssub.s32 %s11, 2
    %s18 = sadd.s32 %s11, 1
    %s19 = ssub.s32 %s11, %s18
    %p20 = scmp.eq.s32.totalorder %s19, 0
    %s22 = sadd.s32 %s21, 1
    %s23 = scalar_select %p20, %s21, %s22
    %p26 = pneg %p20
    %p27 = scmp.eq.s32.totalorder %s11, 1
    %p28 = por %p26, %p27
    %p29 = scmp.ne.s32.totalorder %s21, %s24
    %p30 = scmp.eq.s32.totalorder %s11, 0
    %p31 = por %p29, %p30
    %p32 = scmp.ne.s32.totalorder %s21, %s24
    %p33 = scmp.eq.s32.totalorder %s16, 1
    %p34 = por %p32, %p33
    %p35 = scmp.ne.s32.totalorder %s24, %s25
    %p36 = scmp.eq.s32.totalorder %s16, 0
    %p37 = por %p35, %p36
    %p38 = scmp.ne.s32.totalorder %s24, %s25
    %p39 = scmp.eq.s32.totalorder %s17, 1
    %p40 = por %p38, %p39
    %p42 = scmp.ne.s32.totalorder %s25, %s41
    %p43 = scmp.eq.s32.totalorder %s17, 0
    %p44 = por %p42, %p43
    %s46 = sadd.s32 %s45, 1
    %p49 = scmp.eq.s32.totalorder %s11, 1
    %p50 = scmp.ne.s32.totalorder %s45, %s47
    %p51 = scmp.eq.s32.totalorder %s11, 0
    %p52 = por %p50, %p51
    %p53 = scmp.ne.s32.totalorder %s45, %s47
    %p54 = scmp.eq.s32.totalorder %s16, 1
    %p55 = por %p53, %p54
    %p56 = scmp.ne.s32.totalorder %s47, %s48
    %p57 = scmp.eq.s32.totalorder %s16, 0
    %p58 = por %p56, %p57
    %p59 = scmp.ne.s32.totalorder %s47, %s48
    %p60 = scmp.eq.s32.totalorder %s17, 1
    %p61 = por %p59, %p60
    %p63 = scmp.ne.s32.totalorder %s48, %s62
    %p64 = scmp.eq.s32.totalorder %s17, 0
    %p65 = por %p63, %p64
    %s67 = sadd.s32 %s66, 1
    %p70 = scmp.eq.s32.totalorder %s11, 1
    %p71 = scmp.ne.s32.totalorder %s66, %s68
    %p72 = scmp.eq.s32.totalorder %s11, 0
    %p73 = por %p71, %p72
    %p74 = scmp.ne.s32.totalorder %s66, %s68
    %p75 = scmp.eq.s32.totalorder %s16, 1
    %p76 = por %p74, %p75
    %p77 = scmp.ne.s32.totalorder %s68, %s69
    %p78 = scmp.eq.s32.totalorder %s16, 0
    %p79 = por %p77, %p78
    %p80 = scmp.ne.s32.totalorder %s68, %s69
    %p81 = scmp.eq.s32.totalorder %s17, 1
    %p82 = por %p80, %p81
    %p84 = scmp.ne.s32.totalorder %s69, %s83
    %p85 = scmp.eq.s32.totalorder %s17, 0
    %p86 = por %p84, %p85
    %s88 = sadd.s32 %s87, 1
    %p91 = scmp.eq.s32.totalorder %s11, 1
    %p92 = scmp.ne.s32.totalorder %s87, %s89
    %p93 = scmp.eq.s32.totalorder %s11, 0
    %p94 = por %p92, %p93
    %p95 = scmp.ne.s32.totalorder %s87, %s89
    %p96 = scmp.eq.s32.totalorder %s16, 1
    %p97 = por %p95, %p96
    %p98 = scmp.ne.s32.totalorder %s89, %s90
    %p99 = scmp.eq.s32.totalorder %s16, 0
    %p100 = por %p98, %p99
    %p101 = scmp.ne.s32.totalorder %s89, %s90
    %p102 = scmp.eq.s32.totalorder %s17, 1
    %p103 = por %p101, %p102
    %p105 = scmp.ne.s32.totalorder %s90, %s104
    %p106 = scmp.eq.s32.totalorder %s17, 0
    %p107 = por %p105, %p106
    %s109 = sadd.s32 %s108, 1
    %p112 = scmp.eq.s32.totalorder %s11, 1
    %p113 = scmp.ne.s32.totalorder %s108, %s110
    %p114 = scmp.eq.s32.totalorder %s11, 0
    %p115 = por %p113, %p114
    %p116 = scmp.ne.s32.totalorder %s108, %s110
    %p117 = scmp.eq.s32.totalorder %s16, 1
    %p118 = por %p116, %p117
    %p119 = scmp.ne.s32.totalorder %s110, %s111
    %p120 = scmp.eq.s32.totalorder %s16, 0
    %p121 = por %p119, %p120
    %p122 = scmp.ne.s32.totalorder %s110, %s111
    %p123 = scmp.eq.s32.totalorder %s17, 1
    %p124 = por %p122, %p123
    %p126 = scmp.ne.s32.totalorder %s111, %s125
    %p127 = scmp.eq.s32.totalorder %s17, 0
    %p128 = por %p126, %p127
    %s129 = ssub.s32 %s11, %s18
    %p130 = scmp.eq.s32.totalorder %s129, 0
    %s132 = sadd.s32 %s131, 1
    %s133 = scalar_select %p130, %s131, %s132
    %p136 = pneg %p130
    %p137 = scmp.eq.s32.totalorder %s11, 1
    %p138 = por %p136, %p137
    %p139 = scmp.ne.s32.totalorder %s131, %s134
    %p140 = scmp.eq.s32.totalorder %s11, 0
    %p141 = por %p139, %p140
    %p142 = scmp.ne.s32.totalorder %s131, %s134
    %p143 = scmp.eq.s32.totalorder %s16, 1
    %p144 = por %p142, %p143
    %p145 = scmp.ne.s32.totalorder %s134, %s135
    %p146 = scmp.eq.s32.totalorder %s16, 0
    %p147 = por %p145, %p146
    %p148 = scmp.ne.s32.totalorder %s134, %s135
    %p149 = scmp.eq.s32.totalorder %s17, 1
    %p150 = por %p148, %p149
    %p152 = scmp.ne.s32.totalorder %s135, %s151
    %p153 = scmp.eq.s32.totalorder %s17, 0
    %p154 = por %p152, %p153
    %p155 = scmp.le.s32.totalorder 1, %s11
    %p156 = scmp.lt.s32.totalorder %s11, 3
    %p157 = pnand %p155, %p156
    %p158 = pneg %p157
    // Predicated region
    $region9: #{tpu_custom_call.1} parent=5 // pred_check
      _
    $region10: #{tpu_custom_call.1} parent=5 // pred_check_branch
      %160 = sbr.rel (%p157) target = $region12
    $region11: #{tpu_custom_call.1} parent=5 // pred_region
      %s161 = ssub.s32 %s11, 1
      // Predicated region
      $region13: #{tpu_custom_call.1} parent=11 // pred_check
        %p162 = pneg %p58
      $region14: #{tpu_custom_call.1} parent=11 // pred_check_branch
        %164 = sbr.rel (%p162) target = $region16
      $region15: #{tpu_custom_call.1} parent=11 // pred_region
        _
      $region16: #{tpu_custom_call.1} parent=11 // pred_fallthru
        _
      // Predicated region
      $region17: #{tpu_custom_call.1} parent=11 // pred_check
        %p165 = pneg %p79
      $region18: #{tpu_custom_call.1} parent=11 // pred_check_branch
        %167 = sbr.rel (%p165) target = $region20
      $region19: #{tpu_custom_call.1} parent=11 // pred_region
        _
      $region20: #{tpu_custom_call.1} parent=11 // pred_fallthru
        _
      // Predicated region
      $region21: #{tpu_custom_call.1} parent=11 // pred_check
        %p168 = pneg %p100
      $region22: #{tpu_custom_call.1} parent=11 // pred_check_branch
        %170 = sbr.rel (%p168) target = $region24
      $region23: #{tpu_custom_call.1} parent=11 // pred_region
        _
      $region24: #{tpu_custom_call.1} parent=11 // pred_fallthru
        _
      // Predicated region
      $region25: #{tpu_custom_call.1} parent=11 // pred_check
        %p171 = pneg %p121
      $region26: #{tpu_custom_call.1} parent=11 // pred_check_branch
        %173 = sbr.rel (%p171) target = $region28
      $region27: #{tpu_custom_call.1} parent=11 // pred_region
        _
      $region28: #{tpu_custom_call.1} parent=11 // pred_fallthru
        _
    $region12: #{tpu_custom_call.1} parent=5 // pred_fallthru
      _
    %p174 = scmp.lt.s32.totalorder %s11, 2
    // Predicated region
    $region29: #{tpu_custom_call.1} parent=5 // pred_check
      %p175 = pneg %p174
    $region30: #{tpu_custom_call.1} parent=5 // pred_check_branch
      %177 = sbr.rel (%p175) target = $region32
    $region31: #{tpu_custom_call.1} parent=5 // pred_region
      // Predicated region
      $region33: #{tpu_custom_call.1} parent=31 // pred_check
        %p178 = pneg %p31
      $region34: #{tpu_custom_call.1} parent=31 // pred_check_branch
        %180 = sbr.rel (%p178) target = $region36
      $region35: #{tpu_custom_call.1} parent=31 // pred_region
        %p181 = scmp.lt.s32.totalorder %s11, 1
        %s182 = scalar_select %p181, %s11, 1
        %s183 = smul.addr %s182, 2
        %s184 = smul.addr %s183, 8
        %s185 = scalar_lea.vmem %s0, %s184
      $region36: #{tpu_custom_call.1} parent=31 // pred_fallthru
        _
    $region32: #{tpu_custom_call.1} parent=5 // pred_fallthru
      _
    %p186 = scmp.le.s32.totalorder 1, %s11
    %p187 = scmp.lt.s32.totalorder %s11, 3
    %p188 = pnand %p186, %p187
    %p189 = pneg %p188
    // Predicated region
    $region37: #{tpu_custom_call.1} parent=5 // pred_check
      _
    $region38: #{tpu_custom_call.1} parent=5 // pred_check_branch
      %191 = sbr.rel (%p188) target = $region40
    $region39: #{tpu_custom_call.1} parent=5 // pred_region
      %s192 = ssub.s32 %s11, 1
      %p193 = scmp.lt.s32.totalorder %s16, 1
      %s194 = scalar_select %p193, %s16, 1
      %s195 = smul.addr %s194, 2
      %s196 = smul.addr %s195, 8
      %s197 = scalar_lea.vmem %s0, %s196
      %p198 = pneg %p37
      %p199 = pneg %p34
      %p200 = pneg %p58
      %p201 = pneg %p55
      %p202 = pneg %p79
      %p203 = pneg %p76
      %p204 = pneg %p100
      %p205 = pneg %p97
      %p206 = pneg %p121
      %p207 = pneg %p118
      %p208 = pneg %p147
      %p209 = pneg %p144
      %p210 = scmp.lt.s32.totalorder %s16, 1
      %s211 = scalar_select %p210, %s16, 1
      %s212 = smul.addr %s211, 2
      %s213 = smul.addr %s212, 8
      %s214 = scalar_lea.vmem %s5, %s213
      %p215 = scmp.lt.s32.totalorder %s16, 1
      %s216 = scalar_select %p215, %s16, 1
      %s217 = smul.addr %s216, 2
      %s218 = smul.addr %s217, 8
      %s219 = scalar_lea.vmem %s0, %s218
      %p220 = scmp.lt.s32.totalorder %s16, 1
      %s221 = scalar_select %p220, %s16, 1
      %s222 = smul.addr %s221, 2
      %s223 = smul.addr %s222, 8
      %s224 = scalar_lea.vmem %s5, %s223
      %v226 = vld [vmem:[%s219] sm:$0xff]
      %v227 = vld [vmem:[%s219 + $0x8] sm:$0xff]
      %v228 = vpack.c.bf16 %v227, %v226
      %v229 = vlaneseq
      %v230 = vshrl.u32 %v229, 7
      %v231 = vadd.s32 %v230, 8
      %vm232 = vcmp.lt.s32.totalorder %v230, 0
      %v233 = vsub.s32 0, %v230
      %v234 = vsel %vm232, %v233, %v230
      %v235 = vshrl.u32 %v234, 4
      %v236 = vand.u32 %v234, 15
      %v237 = vsub.s32 0, %v236
      %v238 = vsel %vm232, %v237, %v236
      %vm239 = vcmp.lt.s32.totalorder %v231, 0
      %v240 = vsub.s32 0, %v231
      %v241 = vsel %vm239, %v240, %v231
      %v242 = vshrl.u32 %v241, 4
      %v243 = vand.u32 %v241, 15
      %v244 = vsub.s32 0, %v243
      %v245 = vsel %vm239, %v244, %v243
      %vm246 = vcmp.ge.s32.totalorder %v238, 1
      %vm247 = vcmp.ge.s32.totalorder %v245, 1
      %v248 = vrot.slane %v226, 7
      %v249 = vrot.slane %v227, 7
      %vm250 = vcmp.lt.s32.totalorder %v230, 1
      %v251 = vsel %vm250, %v248, %v249
      %v252 = vsel %vm250, %v249, %v248
      %v253 = vsel %vm246, 1, 0
      %v254 = vsel %vm247, 1, 0
      %vm255 = vcmp.eq.s32.totalorder %v253, 1
      %vm256 = vcmp.eq.s32.totalorder %v254, 1
      %v257 = vsel %vm255, %v252, 0.0
      %v258 = vsel %vm256, %v251, 0.0
      %v259 = vpack.c.bf16 %v258, %v257
      %vm260 = vcmp.lt.s32.totalorder %v238, 15
      %vm261 = vcmp.lt.s32.totalorder %v245, 15
      %v262 = vrot.slane %v226, 1
      %v263 = vrot.slane %v227, 1
      %vm264 = vcmp.lt.s32.totalorder %v230, 7
      %v265 = vsel %vm264, %v262, %v263
      %v266 = vsel %vm264, %v263, %v262
      %v267 = vsel %vm260, 1, 0
      %v268 = vsel %vm261, 1, 0
      %vm269 = vcmp.eq.s32.totalorder %v267, 1
      %vm270 = vcmp.eq.s32.totalorder %v268, 1
      %v271 = vsel %vm269, %v265, 0.0
      %v272 = vsel %vm270, %v266, 0.0
      %v273 = vpack.c.bf16 %v272, %v271
      %s274 = scalar_lea.vmem %s1, 2
      %v275 = vld [vmem:[%s274] sm:$0x3]
      %v276 = vld [vmem:[%s1] sm:$0x3]
      %vm277 = vcmask 31744
      %v279 = vsel %vm277, %v259, 0
      %vm281 = vcmask 1041408
      %v283 = vsel %vm281, %v276, 0
      %285 = vmatpush.bf16.msra.mxu0 0
      %286 = vmatpush.bf16.msra.mxu0 0
      %287 = vmatpush.bf16.msra.mxu0 0
      %288 = vmatpush.bf16.msra.mxu0 0
      %289 = vmatpush.bf16.msra.mxu0 0
      %290 = vmatpush.bf16.msra.mxu0 0
      %291 = vmatpush.bf16.msra.mxu0 0
      %292 = vmatpush.bf16.msra.mxu0 %v283
      %293 = vmatmul.bf16.gmra.mxu0 %v279
      %v294 = vpop.f32.mrf.mxu0
      %v295 = vadd.f32 0.0, %v294
      %v296 = vpop.f32.mrf.mxu0
      %v297 = vadd.f32 0.0, %v296
      %298 = vdwg.mxu0
      %v300 = vsel %vm277, %v228, 0
      %v303 = vsel %vm281, %v275, 0
      %305 = vmatpush.bf16.msra.mxu0 0
      %306 = vmatpush.bf16.msra.mxu0 0
      %307 = vmatpush.bf16.msra.mxu0 0
      %308 = vmatpush.bf16.msra.mxu0 0
      %309 = vmatpush.bf16.msra.mxu0 0
      %310 = vmatpush.bf16.msra.mxu0 0
      %311 = vmatpush.bf16.msra.mxu0 0
      %312 = vmatpush.bf16.msra.mxu0 %v303
      %313 = vmatmul.bf16.gmra.mxu0 %v300
      %v314 = vpop.f32.mrf.mxu0
      %v315 = vadd.f32 %v295, %v314
      %v316 = vpop.f32.mrf.mxu0
      %v317 = vadd.f32 %v297, %v316
      %318 = vdwg.mxu0
      %s319 = scalar_lea.vmem %s1, 4
      %v320 = vld [vmem:[%s319] sm:$0x3]
      %v322 = vsel %vm277, %v273, 0
      %v325 = vsel %vm281, %v320, 0
      %327 = vmatpush.bf16.msra.mxu0 0
      %328 = vmatpush.bf16.msra.mxu0 0
      %329 = vmatpush.bf16.msra.mxu0 0
      %330 = vmatpush.bf16.msra.mxu0 0
      %331 = vmatpush.bf16.msra.mxu0 0
      %332 = vmatpush.bf16.msra.mxu0 0
      %333 = vmatpush.bf16.msra.mxu0 0
      %334 = vmatpush.bf16.msra.mxu0 %v325
      %335 = vmatmul.bf16.gmra.mxu0 %v322
      %v336 = vpop.f32.mrf.mxu0
      %v337 = vadd.f32 0.0, %v336
      %v338 = vpop.f32.mrf.mxu0
      %v339 = vadd.f32 0.0, %v338
      %340 = vdwg.mxu0
      %v341 = vadd.f32 %v315, %v337
      %v342 = vadd.f32 %v317, %v339
      %v343 = vld [vmem:[%s2] sm:$0x1]
      %v345 = vperm.slane %v343, 0
      %v347 = vadd.f32 %v341, %v345
      %v348 = vadd.f32 %v342, %v345
      %v349 = vpack.c.bf16 %v348, %v347
      %v350 = vld [vmem:[%s3] sm:$0x3]
      %v351 = vld [vmem:[%s4] sm:$0x1]
      %v353 = vperm.slane %v351, 0
      %v356 = vsel %vm277, %v349, 0
      %v359 = vsel %vm281, %v350, 0
      %361 = vmatpush.bf16.msra.mxu0 0
      %362 = vmatpush.bf16.msra.mxu0 0
      %363 = vmatpush.bf16.msra.mxu0 0
      %364 = vmatpush.bf16.msra.mxu0 0
      %365 = vmatpush.bf16.msra.mxu0 0
      %366 = vmatpush.bf16.msra.mxu0 0
      %367 = vmatpush.bf16.msra.mxu0 0
      %368 = vmatpush.bf16.msra.mxu0 %v359
      %369 = vmatmul.bf16.gmra.mxu0 %v356
      %v370 = vpop.f32.mrf.mxu0
      %v371 = vadd.f32 %v353, %v370
      %v372 = vpop.f32.mrf.mxu0
      %v373 = vadd.f32 %v353, %v372
      %374 = vdwg.mxu0
      %v375 = vadd.f32 %v371, %v226
      %v376 = vadd.f32 %v373, %v227
      %v377 = vmul.f32 %v375, 0.2
      %v378 = vmul.f32 %v376, 0.2
      %v379 = vmax.f32 %v375, %v377
      %v380 = vmax.f32 %v376, %v378
      %v381 = vpack.c.bf16 %v380, %v379
      %vm382 = vcmp.ge.s32.totalorder %v238, 2
      %vm383 = vcmp.ge.s32.totalorder %v245, 2
      %v384 = vrot.slane %v379, 6
      %v385 = vrot.slane %v380, 6
      %vm386 = vcmp.lt.s32.totalorder %v230, 2
      %v387 = vsel %vm386, %v384, %v385
      %v388 = vsel %vm386, %v385, %v384
      %v389 = vsel %vm382, 1, 0
      %v390 = vsel %vm383, 1, 0
      %vm391 = vcmp.eq.s32.totalorder %v389, 1
      %vm392 = vcmp.eq.s32.totalorder %v390, 1
      %v393 = vsel %vm391, %v388, 0.0
      %v394 = vsel %vm392, %v387, 0.0
      %v395 = vpack.c.bf16 %v394, %v393
      %vm396 = vcmp.lt.s32.totalorder %v238, 14
      %vm397 = vcmp.lt.s32.totalorder %v245, 14
      %v398 = vrot.slane %v379, 2
      %v399 = vrot.slane %v380, 2
      %vm400 = vcmp.lt.s32.totalorder %v230, 6
      %v401 = vsel %vm400, %v398, %v399
      %v402 = vsel %vm400, %v399, %v398
      %v403 = vsel %vm396, 1, 0
      %v404 = vsel %vm397, 1, 0
      %vm405 = vcmp.eq.s32.totalorder %v403, 1
      %vm406 = vcmp.eq.s32.totalorder %v404, 1
      %v407 = vsel %vm405, %v401, 0.0
      %v408 = vsel %vm406, %v402, 0.0
      %v409 = vpack.c.bf16 %v408, %v407
      %s410 = scalar_lea.vmem %s1, 8
      %v411 = vld [vmem:[%s410] sm:$0x3]
      %s412 = scalar_lea.vmem %s1, 6
      %v413 = vld [vmem:[%s412] sm:$0x3]
      %v415 = vsel %vm277, %v395, 0
      %v418 = vsel %vm281, %v413, 0
      %420 = vmatpush.bf16.msra.mxu0 0
      %421 = vmatpush.bf16.msra.mxu0 0
      %422 = vmatpush.bf16.msra.mxu0 0
      %423 = vmatpush.bf16.msra.mxu0 0
      %424 = vmatpush.bf16.msra.mxu0 0
      %425 = vmatpush.bf16.msra.mxu0 0
      %426 = vmatpush.bf16.msra.mxu0 0
      %427 = vmatpush.bf16.msra.mxu0 %v418
      %428 = vmatmul.bf16.gmra.mxu0 %v415
      %v429 = vpop.f32.mrf.mxu0
      %v430 = vadd.f32 0.0, %v429
      %v431 = vpop.f32.mrf.mxu0
      %v432 = vadd.f32 0.0, %v431
      %433 = vdwg.mxu0
      %v435 = vsel %vm277, %v381, 0
      %v438 = vsel %vm281, %v411, 0
      %440 = vmatpush.bf16.msra.mxu0 0
      %441 = vmatpush.bf16.msra.mxu0 0
      %442 = vmatpush.bf16.msra.mxu0 0
      %443 = vmatpush.bf16.msra.mxu0 0
      %444 = vmatpush.bf16.msra.mxu0 0
      %445 = vmatpush.bf16.msra.mxu0 0
      %446 = vmatpush.bf16.msra.mxu0 0
      %447 = vmatpush.bf16.msra.mxu0 %v438
      %448 = vmatmul.bf16.gmra.mxu0 %v435
      %v449 = vpop.f32.mrf.mxu0
      %v450 = vadd.f32 %v430, %v449
      %v451 = vpop.f32.mrf.mxu0
      %v452 = vadd.f32 %v432, %v451
      %453 = vdwg.mxu0
      %s454 = scalar_lea.vmem %s1, 10
      %v455 = vld [vmem:[%s454] sm:$0x3]
      %v457 = vsel %vm277, %v409, 0
      %v460 = vsel %vm281, %v455, 0
      %462 = vmatpush.bf16.msra.mxu0 0
      %463 = vmatpush.bf16.msra.mxu0 0
      %464 = vmatpush.bf16.msra.mxu0 0
      %465 = vmatpush.bf16.msra.mxu0 0
      %466 = vmatpush.bf16.msra.mxu0 0
      %467 = vmatpush.bf16.msra.mxu0 0
      %468 = vmatpush.bf16.msra.mxu0 0
      %469 = vmatpush.bf16.msra.mxu0 %v460
      %470 = vmatmul.bf16.gmra.mxu0 %v457
      %v471 = vpop.f32.mrf.mxu0
      %v472 = vadd.f32 0.0, %v471
      %v473 = vpop.f32.mrf.mxu0
      %v474 = vadd.f32 0.0, %v473
      %475 = vdwg.mxu0
      %v476 = vadd.f32 %v450, %v472
      %v477 = vadd.f32 %v452, %v474
      %s478 = scalar_lea.vmem %s2, 1
      %v479 = vld [vmem:[%s478] sm:$0x1]
      %v481 = vperm.slane %v479, 0
      %v483 = vadd.f32 %v476, %v481
      %v484 = vadd.f32 %v477, %v481
      %v485 = vpack.c.bf16 %v484, %v483
      %s486 = scalar_lea.vmem %s3, 2
      %v487 = vld [vmem:[%s486] sm:$0x3]
      %s488 = scalar_lea.vmem %s4, 1
      %v489 = vld [vmem:[%s488] sm:$0x1]
      %v491 = vperm.slane %v489, 0
      %v494 = vsel %vm277, %v485, 0
      %v497 = vsel %vm281, %v487, 0
      %499 = vmatpush.bf16.msra.mxu0 0
      %500 = vmatpush.bf16.msra.mxu0 0
      %501 = vmatpush.bf16.msra.mxu0 0
      %502 = vmatpush.bf16.msra.mxu0 0
      %503 = vmatpush.bf16.msra.mxu0 0
      %504 = vmatpush.bf16.msra.mxu0 0
      %505 = vmatpush.bf16.msra.mxu0 0
      %506 = vmatpush.bf16.msra.mxu0 %v497
      %507 = vmatmul.bf16.gmra.mxu0 %v494
      %v508 = vpop.f32.mrf.mxu0
      %v509 = vadd.f32 %v491, %v508
      %v510 = vpop.f32.mrf.mxu0
      %v511 = vadd.f32 %v491, %v510
      %512 = vdwg.mxu0
      %v513 = vadd.f32 %v509, %v379
      %v514 = vadd.f32 %v511, %v380
      %v515 = vmul.f32 %v513, 0.2
      %v516 = vmul.f32 %v514, 0.2
      %v517 = vmax.f32 %v513, %v515
      %v518 = vmax.f32 %v514, %v516
      %v519 = vpack.c.bf16 %v518, %v517
      %vm520 = vcmp.ge.s32.totalorder %v238, 4
      %vm521 = vcmp.ge.s32.totalorder %v245, 4
      %v522 = vrot.slane %v517, 4
      %v523 = vrot.slane %v518, 4
      %vm524 = vcmp.lt.s32.totalorder %v230, 4
      %v525 = vsel %vm524, %v522, %v523
      %v526 = vsel %vm524, %v523, %v522
      %v527 = vsel %vm520, 1, 0
      %v528 = vsel %vm521, 1, 0
      %vm529 = vcmp.eq.s32.totalorder %v527, 1
      %vm530 = vcmp.eq.s32.totalorder %v528, 1
      %v531 = vsel %vm529, %v526, 0.0
      %v532 = vsel %vm530, %v525, 0.0
      %v533 = vpack.c.bf16 %v532, %v531
      %vm534 = vcmp.lt.s32.totalorder %v238, 12
      %vm535 = vcmp.lt.s32.totalorder %v245, 12
      %v536 = vsel %vm534, 1, 0
      %v537 = vsel %vm535, 1, 0
      %vm538 = vcmp.eq.s32.totalorder %v536, 1
      %vm539 = vcmp.eq.s32.totalorder %v537, 1
      %v540 = vsel %vm538, %v525, 0.0
      %v541 = vsel %vm539, %v526, 0.0
      %v542 = vpack.c.bf16 %v541, %v540
      %s543 = scalar_lea.vmem %s1, 14
      %v544 = vld [vmem:[%s543] sm:$0x3]
      %s545 = scalar_lea.vmem %s1, 12
      %v546 = vld [vmem:[%s545] sm:$0x3]
      %v548 = vsel %vm277, %v533, 0
      %v551 = vsel %vm281, %v546, 0
      %553 = vmatpush.bf16.msra.mxu0 0
      %554 = vmatpush.bf16.msra.mxu0 0
      %555 = vmatpush.bf16.msra.mxu0 0
      %556 = vmatpush.bf16.msra.mxu0 0
      %557 = vmatpush.bf16.msra.mxu0 0
      %558 = vmatpush.bf16.msra.mxu0 0
      %559 = vmatpush.bf16.msra.mxu0 0
      %560 = vmatpush.bf16.msra.mxu0 %v551
      %561 = vmatmul.bf16.gmra.mxu0 %v548
      %v562 = vpop.f32.mrf.mxu0
      %v563 = vadd.f32 0.0, %v562
      %v564 = vpop.f32.mrf.mxu0
      %v565 = vadd.f32 0.0, %v564
      %566 = vdwg.mxu0
      %v568 = vsel %vm277, %v519, 0
      %v571 = vsel %vm281, %v544, 0
      %573 = vmatpush.bf16.msra.mxu0 0
      %574 = vmatpush.bf16.msra.mxu0 0
      %575 = vmatpush.bf16.msra.mxu0 0
      %576 = vmatpush.bf16.msra.mxu0 0
      %577 = vmatpush.bf16.msra.mxu0 0
      %578 = vmatpush.bf16.msra.mxu0 0
      %579 = vmatpush.bf16.msra.mxu0 0
      %580 = vmatpush.bf16.msra.mxu0 %v571
      %581 = vmatmul.bf16.gmra.mxu0 %v568
      %v582 = vpop.f32.mrf.mxu0
      %v583 = vadd.f32 %v563, %v582
      %v584 = vpop.f32.mrf.mxu0
      %v585 = vadd.f32 %v565, %v584
      %586 = vdwg.mxu0
      %s587 = scalar_lea.vmem %s1, 16
      %v588 = vld [vmem:[%s587] sm:$0x3]
      %v590 = vsel %vm277, %v542, 0
      %v593 = vsel %vm281, %v588, 0
      %595 = vmatpush.bf16.msra.mxu0 0
      %596 = vmatpush.bf16.msra.mxu0 0
      %597 = vmatpush.bf16.msra.mxu0 0
      %598 = vmatpush.bf16.msra.mxu0 0
      %599 = vmatpush.bf16.msra.mxu0 0
      %600 = vmatpush.bf16.msra.mxu0 0
      %601 = vmatpush.bf16.msra.mxu0 0
      %602 = vmatpush.bf16.msra.mxu0 %v593
      %603 = vmatmul.bf16.gmra.mxu0 %v590
      %v604 = vpop.f32.mrf.mxu0
      %v605 = vadd.f32 0.0, %v604
      %v606 = vpop.f32.mrf.mxu0
      %v607 = vadd.f32 0.0, %v606
      %608 = vdwg.mxu0
      %v609 = vadd.f32 %v583, %v605
      %v610 = vadd.f32 %v585, %v607
      %s611 = scalar_lea.vmem %s2, 2
      %v612 = vld [vmem:[%s611] sm:$0x1]
      %v614 = vperm.slane %v612, 0
      %v616 = vadd.f32 %v609, %v614
      %v617 = vadd.f32 %v610, %v614
      %v618 = vpack.c.bf16 %v617, %v616
      %s619 = scalar_lea.vmem %s3, 4
      %v620 = vld [vmem:[%s619] sm:$0x3]
      %s621 = scalar_lea.vmem %s4, 2
      %v622 = vld [vmem:[%s621] sm:$0x1]
      %v624 = vperm.slane %v622, 0
      %v627 = vsel %vm277, %v618, 0
      %v630 = vsel %vm281, %v620, 0
      %632 = vmatpush.bf16.msra.mxu0 0
      %633 = vmatpush.bf16.msra.mxu0 0
      %634 = vmatpush.bf16.msra.mxu0 0
      %635 = vmatpush.bf16.msra.mxu0 0
      %636 = vmatpush.bf16.msra.mxu0 0
      %637 = vmatpush.bf16.msra.mxu0 0
      %638 = vmatpush.bf16.msra.mxu0 0
      %639 = vmatpush.bf16.msra.mxu0 %v630
      %640 = vmatmul.bf16.gmra.mxu0 %v627
      %v641 = vpop.f32.mrf.mxu0
      %v642 = vadd.f32 %v624, %v641
      %v643 = vpop.f32.mrf.mxu0
      %v644 = vadd.f32 %v624, %v643
      %645 = vdwg.mxu0
      %v646 = vadd.f32 %v642, %v517
      %v647 = vadd.f32 %v644, %v518
      %v648 = vmul.f32 %v646, 0.2
      %v649 = vmul.f32 %v647, 0.2
      %v650 = vmax.f32 %v646, %v648
      %v651 = vmax.f32 %v647, %v649
      %652 = vst.msk [vmem:[%s224] sm:$0xff] %vm277, %v650
      %653 = vst.msk [vmem:[%s224 + $0x8] sm:$0xff] %vm277, %v651
      %p654 = scmp.lt.s32.totalorder %s16, 1
      %s655 = scalar_select %p654, %s16, 1
      %s656 = smul.addr %s655, 2
      %s657 = smul.addr %s656, 8
      %s658 = scalar_lea.vmem %s5, %s657
      // Predicated region
      $region41: #{tpu_custom_call.1} parent=39 // pred_check
        %p659 = pneg %p144
      $region42: #{tpu_custom_call.1} parent=39 // pred_check_branch
        %661 = sbr.rel (%p659) target = $region44
      $region43: #{tpu_custom_call.1} parent=39 // pred_region
        _
      $region44: #{tpu_custom_call.1} parent=39 // pred_fallthru
        _
    $region40: #{tpu_custom_call.1} parent=5 // pred_fallthru
      _
    %p662 = scmp.le.s32.totalorder 2, %s11
    // Predicated region
    $region45: #{tpu_custom_call.1} parent=5 // pred_check
      %p663 = pneg %p662
    $region46: #{tpu_custom_call.1} parent=5 // pred_check_branch
      %665 = sbr.rel (%p663) target = $region48
    $region47: #{tpu_custom_call.1} parent=5 // pred_region
      %s666 = ssub.s32 %s11, 2
      // Predicated region
      $region49: #{tpu_custom_call.1} parent=47 // pred_check
        %p667 = pneg %p150
      $region50: #{tpu_custom_call.1} parent=47 // pred_check_branch
        %669 = sbr.rel (%p667) target = $region52
      $region51: #{tpu_custom_call.1} parent=47 // pred_region
        %p670 = scmp.lt.s32.totalorder %s17, 1
        %s671 = scalar_select %p670, %s17, 1
        %s672 = smul.addr %s671, 2
        %s673 = smul.addr %s672, 8
        %s674 = scalar_lea.vmem %s5, %s673
      $region52: #{tpu_custom_call.1} parent=47 // pred_fallthru
        _
    $region48: #{tpu_custom_call.1} parent=5 // pred_fallthru
      _
  $region6: #{tpu_custom_call.1} parent=0 // loop_footer
    %s15 = sadd.s32 1, %s11
  $region7: #{tpu_custom_call.1} parent=0 // loop_footer_branch
    %10 = sbr.rel target = $region3
  $region8: #{tpu_custom_call.1} parent=0 // loop_exit
    _

</llo_original>
